<compile_context>
chip_gen: v7x
topology: tpu7x:2x2x1
jax: 0.10.0
libtpu: 0.0.40
codegen_flags: <defaults>
</compile_context>

<pallas_src>
import functools

import jax
import jax.numpy as jnp
from jax.experimental import pallas as pl
from jax.experimental.pallas import tpu as pltpu


def _round_up(x, m):
    return ((x + m - 1) // m) * m


# ----------------------------- Pallas kernel ------------------------------- #
def kgcn_kernel(seed_ref, user_ref, item_ref, ent_ref, rel_ref, wt_ref, b_ref,
                out_ref, *, is_evaluate: bool, drop_rate: float, n_neighbors: int):
    K = n_neighbors
    user = user_ref[...].astype(jnp.float32)          # [TB, D]
    item = item_ref[...].astype(jnp.float32)          # [TB, D]

    # --- user-relation attention scores (unrolled over the small static K axis) ---
    # TODO(synk): switch to an online lax.fori_loop(unroll=True) accumulator if
    # n_neighbors grows beyond ~16 (bounds vreg live ranges).
    cols = []
    for k in range(K):
        r_k = rel_ref[k].astype(jnp.float32)                       # [TB, D]
        cols.append(jnp.sum(user * r_k, axis=-1, keepdims=True))   # [TB, 1]

    # numerically-stable softmax over neighbors, kept as K separate [TB,1] columns
    m = cols[0]
    for k in range(1, K):
        m = jnp.maximum(m, cols[k])
    es = [jnp.exp(c - m) for c in cols]
    denom = es[0]
    for k in range(1, K):
        denom = denom + es[k]
    inv = 1.0 / denom                                  # exact; keeps f32 parity tight
    probs = [e * inv for e in es]                      # p_k computed once, reused

    # --- weighted sum of neighbor entity embeddings ---
    nbr = probs[0] * ent_ref[0].astype(jnp.float32)
    for k in range(1, K):
        nbr = nbr + probs[k] * ent_ref[k].astype(jnp.float32)

    agg = item + nbr                                   # 'sum' aggregator

    if not is_evaluate:
        # Dropout mask from a counter-based integer hash (plain VPU int32 ops:
        # lowers on every TPU generation and in interpret mode, unlike
        # pltpu.prng_* which has no CPU lowering). Per-tile stream via program_id.
        # TODO(synk): statistical parity with torch dropout only (no bit-match).
        tb, d = agg.shape
        row = jax.lax.broadcasted_iota(jnp.int32, (tb, d), 0)
        col = jax.lax.broadcasted_iota(jnp.int32, (tb, d), 1)
        base = (pl.program_id(0) * tb + row) * d + col
        C1 = jnp.int32(-1640531527)    # 0x9E3779B9
        C2 = jnp.int32(-2048144789)    # 0x85EBCA6B
        C3 = jnp.int32(-1028477387)    # 0xC2B2AE35
        h = (base + seed_ref[0]) * C1
        h = h ^ jax.lax.shift_right_logical(h, jnp.int32(16))
        h = h * C2
        h = h ^ jax.lax.shift_right_logical(h, jnp.int32(13))
        h = h * C3
        h = h ^ jax.lax.shift_right_logical(h, jnp.int32(16))
        u = (h & jnp.int32(0x7FFFFF)).astype(jnp.float32) * jnp.float32(1.0 / (1 << 23))
        keep = (u >= jnp.float32(drop_rate)).astype(jnp.float32)
        agg = agg * keep * jnp.float32(1.0 / (1.0 - drop_rate))

    # linear layer (W pre-transposed, resident across grid steps) + relu
    h_out = jnp.dot(agg, wt_ref[...], preferred_element_type=jnp.float32) + b_ref[...]
    h_out = jnp.maximum(h_out, 0.0)                                # [TB, D]

    # sigmoid(sum(user * h, -1)); write as a lane-dense (1, 1, TB) block
    logit = jnp.sum(user * h_out, axis=-1)                         # [TB]
    out_ref[...] = (1.0 / (1.0 + jnp.exp(-logit))).reshape(out_ref.shape)


# ------------------------------ pallas_call wrapper -------------------------- #
def kgcn_pallas(user_emb, item_emb, nbr_ent, nbr_rel, w_t, bias, seed,
                *, is_evaluate=True, drop_rate=0.5, block_b=1024):
    B, D = user_emb.shape
    K = nbr_ent.shape[0]
    assert nbr_ent.shape == (K, B, D) and nbr_rel.shape == (K, B, D)

    stream_dtype = nbr_ent.dtype
    itemsize = jnp.dtype(stream_dtype).itemsize

    # ---- generation-aware VMEM budget (v7x: 64 MiB physical, v5e/v6e: 128 MiB) ----
    try:
        vmem_cap = int(pltpu.get_tpu_info().vmem_capacity_bytes)
    except Exception:
        vmem_cap = 64 * 1024 * 1024
    vmem_limit = max(32 * 1024 * 1024, min(vmem_cap * 3 // 4, 96 * 1024 * 1024))

    # Physical footprint per batch row of the double-buffered streams
    # (ent + rel + user + item): last dim is lane-padded to 128.
    lane_d = _round_up(D, 128)
    bytes_per_row = (2 * K + 2) * lane_d * itemsize
    # resident W^T + bias (f32, constant index_map) + slack for output blocks /
    # internal scratch.
    resident = 2 * (_round_up(D, 8) + 8) * lane_d * 4
    slack = 4 * 1024 * 1024
    stream_budget = max(vmem_limit - resident - slack, 4 * 1024 * 1024)
    max_tb = max(8, (stream_budget // (2 * bytes_per_row)) // 8 * 8)

    TB = min(int(block_b), int(max_tb), _round_up(B, 8))
    if B >= 16:
        # keep >= 2 grid steps so the "parallel" batch axis can split across
        # v7x's two TensorCores
        TB = min(TB, _round_up((B + 1) // 2, 8))
    TB = max(8, (TB // 8) * 8)
    # prefer a tile that divides B: avoids an HBM round-trip jnp.pad of the big
    # [K, B, D] streams
    if B % TB != 0:
        for cand in range(TB, 7, -8):
            if B % cand == 0:
                TB = cand
                break
    B_pad = _round_up(B, TB)
    G = B_pad // TB

    def pad_b(x, axis):
        pad = B_pad - B
        if pad == 0:
            return x
        cfg = [(0, 0)] * x.ndim
        cfg[axis] = (0, pad)
        return jnp.pad(x, cfg)

    user_p = pad_b(user_emb, 0)
    item_p = pad_b(item_emb, 0)
    ent_p = pad_b(nbr_ent, 1)
    rel_p = pad_b(nbr_rel, 1)

    w_t = w_t.astype(jnp.float32)
    bias = bias.astype(jnp.float32).reshape(1, D)

    kernel = functools.partial(kgcn_kernel, is_evaluate=is_evaluate,
                               drop_rate=drop_rate, n_neighbors=K)

    grid_spec = pltpu.PrefetchScalarGridSpec(
        num_scalar_prefetch=1,                                   # seed -> SMEM
        grid=(G,),
        in_specs=[
            pl.BlockSpec((TB, D), lambda i, s: (i, 0)),          # user  [B_pad, D]
            pl.BlockSpec((TB, D), lambda i, s: (i, 0)),          # item  [B_pad, D]
            pl.BlockSpec((K, TB, D), lambda i, s: (0, i, 0)),    # ent   [K, B_pad, D]
            pl.BlockSpec((K, TB, D), lambda i, s: (0, i, 0)),    # rel   [K, B_pad, D]
            pl.BlockSpec((D, D), lambda i, s: (0, 0)),           # W^T   (resident)
            pl.BlockSpec((1, D), lambda i, s: (0, 0)),           # bias  (resident)
        ],
        out_specs=pl.BlockSpec((1, 1, TB), lambda i, s: (i, 0, 0)),
    )

    out = pl.pallas_call(
        kernel,
        out_shape=jax.ShapeDtypeStruct((G, 1, TB), jnp.float32),
        grid_spec=grid_spec,
        compiler_params=pltpu.CompilerParams(
            dimension_semantics=("parallel",),                   # megacore / v7x 2 TCs
            vmem_limit_bytes=int(vmem_limit),
        ),
    )(seed, user_p, item_p, ent_p, rel_p, w_t, bias)
    return out.reshape(-1)[:B]


# ------------------------------- JAX glue ----------------------------------- #
def gather_renorm(table, ids, max_norm=1.0, out_dtype=None):
    """Emulate nn.Embedding(max_norm=1): rows with ||row|| > max_norm are rescaled.
    Optional downcast fuses with the gather (no extra full-tensor HBM pass)."""
    rows = table[ids]
    norm = jnp.linalg.norm(rows, axis=-1, keepdims=True)
    scale = jnp.where(norm > max_norm, max_norm / (norm + 1e-7), 1.0)
    rows = rows * scale
    if out_dtype is not None and rows.dtype != out_dtype:
        rows = rows.astype(out_dtype)
    return rows


def kgcn_forward(params, adj_entity, adj_relation, users, items,
                 is_evaluate=True, drop_rate=0.5, seed=0,
                 block_b=1024, transfer_dtype=jnp.bfloat16):
    user_emb = gather_renorm(params["user_emb"], users, out_dtype=transfer_dtype)
    item_emb = gather_renorm(params["entity_emb"], items, out_dtype=transfer_dtype)
    # gather ids transposed to [K, B] so the [K, B, D] embedding tensors come out
    # directly in the kernel's per-neighbor-slab layout (no extra transpose pass).
    nbr_e_ids = adj_entity[items].T                                  # [K, B]
    nbr_r_ids = adj_relation[items].T                                # [K, B]
    nbr_ent = gather_renorm(params["entity_emb"], nbr_e_ids, out_dtype=transfer_dtype)
    nbr_rel = gather_renorm(params["relation_emb"], nbr_r_ids, out_dtype=transfer_dtype)
    # TODO(synk): move the neighbor gather + max_norm renorm into the kernel via
    # scalar-prefetched id arrays + manual DMA from the HBM embedding tables.

    D = user_emb.shape[-1]
    w_t = params.get("linear_w_t")
    if w_t is None:
        w_t = params["linear_w"].T
    bias = params["linear_b"]
    seed_arr = jnp.array([seed], dtype=jnp.int32)
    return kgcn_pallas(user_emb, item_emb, nbr_ent, nbr_rel, w_t, bias, seed_arr,
                       is_evaluate=is_evaluate, drop_rate=drop_rate,
                       block_b=block_b)


def kgcn_forward_ref(params, adj_entity, adj_relation, users, items):
    """Pure-JAX reference of the eval-mode forward pass."""
    user_emb = gather_renorm(params["user_emb"], users)
    item_emb = gather_renorm(params["entity_emb"], items)
    nbr_ent = gather_renorm(params["entity_emb"], adj_entity[items])     # [B, K, D]
    nbr_rel = gather_renorm(params["relation_emb"], adj_relation[items]) # [B, K, D]

    scores = jnp.sum(user_emb[:, None, :] * nbr_rel, axis=2)
    p = jax.nn.softmax(scores, axis=-1)
    nbr_vec = jnp.sum(p[:, :, None] * nbr_ent, axis=1)
    agg = item_emb + nbr_vec
    h = jax.nn.relu(agg @ params["linear_w"].T + params["linear_b"])
    return jax.nn.sigmoid(jnp.sum(user_emb * h, axis=-1))


# --------------------------------- main -------------------------------------- #
if __name__ == "__main__":
    # small synthetic KG configuration
    n_users, n_entitys, n_relations = 10, 20, 5
    e_dim = 32
    n_neighbors = 8
    batch = 8

    key = jax.random.PRNGKey(0)
    k_ue, k_ee, k_re, k_w, k_b, k_adj_e, k_adj_r, k_u, k_i = jax.random.split(key, 9)

    lim = 1.0 / jnp.sqrt(e_dim)
    params = {
        "user_emb": 0.1 * jax.random.normal(k_ue, (n_users, e_dim), jnp.float32),
        "entity_emb": 0.1 * jax.random.normal(k_ee, (n_entitys, e_dim), jnp.float32),
        "relation_emb": 0.1 * jax.random.normal(k_re, (n_relations, e_dim), jnp.float32),
        # nn.Linear(e_dim, e_dim): weight [out, in], bias [out]
        "linear_w": jax.random.uniform(k_w, (e_dim, e_dim), jnp.float32, -lim, lim),
        "linear_b": jax.random.uniform(k_b, (e_dim,), jnp.float32, -lim, lim),
    }
    # precompute W^T once (avoid a per-forward XLA transpose)
    params["linear_w_t"] = params["linear_w"].T

    adj_entity = jax.random.randint(k_adj_e, (n_entitys, n_neighbors), 0, n_entitys)
    adj_relation = jax.random.randint(k_adj_r, (n_entitys, n_neighbors), 0, n_relations)

    users = jax.random.randint(k_u, (batch,), 0, n_users)
    items = jax.random.randint(k_i, (batch,), 0, n_entitys)

    ref = kgcn_forward_ref(params, adj_entity, adj_relation, users, items)

    # eval mode, f32 streams: deterministic, tight tolerance
    out_f32 = kgcn_forward(params, adj_entity, adj_relation, users, items,
                           is_evaluate=True, transfer_dtype=jnp.float32)
    out_f32 = jax.block_until_ready(out_f32)
    assert out_f32.shape == (batch,)
    assert jnp.allclose(out_f32, ref, atol=1e-3, rtol=1e-3), (out_f32, ref)

    # eval mode, default bf16 streams (halves HBM DMA bytes on the big tensors)
    out_bf16 = kgcn_forward(params, adj_entity, adj_relation, users, items,
                            is_evaluate=True)
    out_bf16 = jax.block_until_ready(out_bf16)
    assert jnp.allclose(out_bf16, ref, atol=3e-2, rtol=3e-2), (out_bf16, ref)

    # training mode: exercises the in-kernel hash-dropout path
    out_train = kgcn_forward(params, adj_entity, adj_relation, users, items,
                             is_evaluate=False, seed=123, transfer_dtype=jnp.float32)
    out_train = jax.block_until_ready(out_train)
    assert out_train.shape == (batch,)
    assert bool(jnp.all(jnp.isfinite(out_train)))
    assert bool(jnp.all((out_train > 0.0) & (out_train < 1.0)))

    print("KERNEL_OK")
</pallas_src>

<mosaic_0001>
module attributes {stable_mosaic.version = 11 : i64} {
  func.func @kgcn_kernel(%arg0: i32, %arg1: memref<1xi32, #tpu.memory_space<smem>>, %arg2: memref<8x32xf32, #tpu.memory_space<vmem>>, %arg3: memref<8x32xf32, #tpu.memory_space<vmem>>, %arg4: memref<8x8x32xf32, #tpu.memory_space<vmem>>, %arg5: memref<8x8x32xf32, #tpu.memory_space<vmem>>, %arg6: memref<32x32xf32, #tpu.memory_space<vmem>>, %arg7: memref<1x32xf32, #tpu.memory_space<vmem>>, %arg8: memref<1x1x8xf32, #tpu.memory_space<vmem>>) attributes {dimension_semantics = [#tpu.dimension_semantics<parallel>], iteration_bounds = array<i64: 1>, scalar_prefetch = 1 : i64, scratch_operands = 0 : i64, tpu.core_type = #tpu.core_type<tc>, window_params = [{transform_indices = @transform_0, window_bounds = array<i64: 8, 32>}, {transform_indices = @transform_1, window_bounds = array<i64: 8, 32>}, {transform_indices = @transform_2, window_bounds = array<i64: 8, 8, 32>}, {transform_indices = @transform_3, window_bounds = array<i64: 8, 8, 32>}, {pipeline_mode = #tpu.pipeline_mode<synchronous>, transform_indices = @transform_4, window_bounds = array<i64: 32, 32>}, {pipeline_mode = #tpu.pipeline_mode<synchronous>, transform_indices = @transform_5, window_bounds = array<i64: 1, 32>}, {transform_indices = @transform_6, window_bounds = array<i64: 1, 1, 8>}]} {
    %c0 = arith.constant 0 : index
    %c0_0 = arith.constant 0 : index
    %0 = vector.load %arg2[%c0, %c0_0] : memref<8x32xf32, #tpu.memory_space<vmem>>, vector<8x32xf32>
    %c0_1 = arith.constant 0 : index
    %c0_2 = arith.constant 0 : index
    %1 = vector.load %arg3[%c0_1, %c0_2] : memref<8x32xf32, #tpu.memory_space<vmem>>, vector<8x32xf32>
    %c0_3 = arith.constant 0 : index
    %c0_4 = arith.constant 0 : index
    %c0_5 = arith.constant 0 : index
    %2 = vector.load %arg5[%c0_3, %c0_4, %c0_5] : memref<8x8x32xf32, #tpu.memory_space<vmem>>, vector<1x8x32xf32>
    %3 = vector.shape_cast %2 : vector<1x8x32xf32> to vector<8x32xf32>
    %4 = arith.mulf %0, %3 : vector<8x32xf32>
    %cst = arith.constant dense<0.000000e+00> : vector<8xf32>
    %5 = vector.multi_reduction <add>, %4, %cst [1] : vector<8x32xf32> to vector<8xf32>
    %6 = vector.shape_cast %5 : vector<8xf32> to vector<8x1xf32>
    %c1 = arith.constant 1 : index
    %c0_6 = arith.constant 0 : index
    %c0_7 = arith.constant 0 : index
    %7 = vector.load %arg5[%c1, %c0_6, %c0_7] : memref<8x8x32xf32, #tpu.memory_space<vmem>>, vector<1x8x32xf32>
    %8 = vector.shape_cast %7 : vector<1x8x32xf32> to vector<8x32xf32>
    %9 = arith.mulf %0, %8 : vector<8x32xf32>
    %cst_8 = arith.constant dense<0.000000e+00> : vector<8xf32>
    %10 = vector.multi_reduction <add>, %9, %cst_8 [1] : vector<8x32xf32> to vector<8xf32>
    %11 = vector.shape_cast %10 : vector<8xf32> to vector<8x1xf32>
    %c2 = arith.constant 2 : index
    %c0_9 = arith.constant 0 : index
    %c0_10 = arith.constant 0 : index
    %12 = vector.load %arg5[%c2, %c0_9, %c0_10] : memref<8x8x32xf32, #tpu.memory_space<vmem>>, vector<1x8x32xf32>
    %13 = vector.shape_cast %12 : vector<1x8x32xf32> to vector<8x32xf32>
    %14 = arith.mulf %0, %13 : vector<8x32xf32>
    %cst_11 = arith.constant dense<0.000000e+00> : vector<8xf32>
    %15 = vector.multi_reduction <add>, %14, %cst_11 [1] : vector<8x32xf32> to vector<8xf32>
    %16 = vector.shape_cast %15 : vector<8xf32> to vector<8x1xf32>
    %c3 = arith.constant 3 : index
    %c0_12 = arith.constant 0 : index
    %c0_13 = arith.constant 0 : index
    %17 = vector.load %arg5[%c3, %c0_12, %c0_13] : memref<8x8x32xf32, #tpu.memory_space<vmem>>, vector<1x8x32xf32>
    %18 = vector.shape_cast %17 : vector<1x8x32xf32> to vector<8x32xf32>
    %19 = arith.mulf %0, %18 : vector<8x32xf32>
    %cst_14 = arith.constant dense<0.000000e+00> : vector<8xf32>
    %20 = vector.multi_reduction <add>, %19, %cst_14 [1] : vector<8x32xf32> to vector<8xf32>
    %21 = vector.shape_cast %20 : vector<8xf32> to vector<8x1xf32>
    %c4 = arith.constant 4 : index
    %c0_15 = arith.constant 0 : index
    %c0_16 = arith.constant 0 : index
    %22 = vector.load %arg5[%c4, %c0_15, %c0_16] : memref<8x8x32xf32, #tpu.memory_space<vmem>>, vector<1x8x32xf32>
    %23 = vector.shape_cast %22 : vector<1x8x32xf32> to vector<8x32xf32>
    %24 = arith.mulf %0, %23 : vector<8x32xf32>
    %cst_17 = arith.constant dense<0.000000e+00> : vector<8xf32>
    %25 = vector.multi_reduction <add>, %24, %cst_17 [1] : vector<8x32xf32> to vector<8xf32>
    %26 = vector.shape_cast %25 : vector<8xf32> to vector<8x1xf32>
    %c5 = arith.constant 5 : index
    %c0_18 = arith.constant 0 : index
    %c0_19 = arith.constant 0 : index
    %27 = vector.load %arg5[%c5, %c0_18, %c0_19] : memref<8x8x32xf32, #tpu.memory_space<vmem>>, vector<1x8x32xf32>
    %28 = vector.shape_cast %27 : vector<1x8x32xf32> to vector<8x32xf32>
    %29 = arith.mulf %0, %28 : vector<8x32xf32>
    %cst_20 = arith.constant dense<0.000000e+00> : vector<8xf32>
    %30 = vector.multi_reduction <add>, %29, %cst_20 [1] : vector<8x32xf32> to vector<8xf32>
    %31 = vector.shape_cast %30 : vector<8xf32> to vector<8x1xf32>
    %c6 = arith.constant 6 : index
    %c0_21 = arith.constant 0 : index
    %c0_22 = arith.constant 0 : index
    %32 = vector.load %arg5[%c6, %c0_21, %c0_22] : memref<8x8x32xf32, #tpu.memory_space<vmem>>, vector<1x8x32xf32>
    %33 = vector.shape_cast %32 : vector<1x8x32xf32> to vector<8x32xf32>
    %34 = arith.mulf %0, %33 : vector<8x32xf32>
    %cst_23 = arith.constant dense<0.000000e+00> : vector<8xf32>
    %35 = vector.multi_reduction <add>, %34, %cst_23 [1] : vector<8x32xf32> to vector<8xf32>
    %36 = vector.shape_cast %35 : vector<8xf32> to vector<8x1xf32>
    %c7 = arith.constant 7 : index
    %c0_24 = arith.constant 0 : index
    %c0_25 = arith.constant 0 : index
    %37 = vector.load %arg5[%c7, %c0_24, %c0_25] : memref<8x8x32xf32, #tpu.memory_space<vmem>>, vector<1x8x32xf32>
    %38 = vector.shape_cast %37 : vector<1x8x32xf32> to vector<8x32xf32>
    %39 = arith.mulf %0, %38 : vector<8x32xf32>
    %cst_26 = arith.constant dense<0.000000e+00> : vector<8xf32>
    %40 = vector.multi_reduction <add>, %39, %cst_26 [1] : vector<8x32xf32> to vector<8xf32>
    %41 = vector.shape_cast %40 : vector<8xf32> to vector<8x1xf32>
    %42 = arith.maximumf %6, %11 : vector<8x1xf32>
    %43 = arith.maximumf %42, %16 : vector<8x1xf32>
    %44 = arith.maximumf %43, %21 : vector<8x1xf32>
    %45 = arith.maximumf %44, %26 : vector<8x1xf32>
    %46 = arith.maximumf %45, %31 : vector<8x1xf32>
    %47 = arith.maximumf %46, %36 : vector<8x1xf32>
    %48 = arith.maximumf %47, %41 : vector<8x1xf32>
    %49 = arith.subf %6, %48 : vector<8x1xf32>
    %50 = math.exp %49 : vector<8x1xf32>
    %51 = arith.subf %11, %48 : vector<8x1xf32>
    %52 = math.exp %51 : vector<8x1xf32>
    %53 = arith.subf %16, %48 : vector<8x1xf32>
    %54 = math.exp %53 : vector<8x1xf32>
    %55 = arith.subf %21, %48 : vector<8x1xf32>
    %56 = math.exp %55 : vector<8x1xf32>
    %57 = arith.subf %26, %48 : vector<8x1xf32>
    %58 = math.exp %57 : vector<8x1xf32>
    %59 = arith.subf %31, %48 : vector<8x1xf32>
    %60 = math.exp %59 : vector<8x1xf32>
    %61 = arith.subf %36, %48 : vector<8x1xf32>
    %62 = math.exp %61 : vector<8x1xf32>
    %63 = arith.subf %41, %48 : vector<8x1xf32>
    %64 = math.exp %63 : vector<8x1xf32>
    %65 = arith.addf %50, %52 : vector<8x1xf32>
    %66 = arith.addf %65, %54 : vector<8x1xf32>
    %67 = arith.addf %66, %56 : vector<8x1xf32>
    %68 = arith.addf %67, %58 : vector<8x1xf32>
    %69 = arith.addf %68, %60 : vector<8x1xf32>
    %70 = arith.addf %69, %62 : vector<8x1xf32>
    %71 = arith.addf %70, %64 : vector<8x1xf32>
    %cst_27 = arith.constant 1.000000e+00 : f32
    %72 = vector.broadcast %cst_27 : f32 to vector<8x1xf32>
    %73 = arith.divf %72, %71 : vector<8x1xf32>
    %74 = arith.mulf %50, %73 : vector<8x1xf32>
    %75 = arith.mulf %52, %73 : vector<8x1xf32>
    %76 = arith.mulf %54, %73 : vector<8x1xf32>
    %77 = arith.mulf %56, %73 : vector<8x1xf32>
    %78 = arith.mulf %58, %73 : vector<8x1xf32>
    %79 = arith.mulf %60, %73 : vector<8x1xf32>
    %80 = arith.mulf %62, %73 : vector<8x1xf32>
    %81 = arith.mulf %64, %73 : vector<8x1xf32>
    %c0_28 = arith.constant 0 : index
    %c0_29 = arith.constant 0 : index
    %c0_30 = arith.constant 0 : index
    %82 = vector.load %arg4[%c0_28, %c0_29, %c0_30] : memref<8x8x32xf32, #tpu.memory_space<vmem>>, vector<1x8x32xf32>
    %83 = vector.shape_cast %82 : vector<1x8x32xf32> to vector<8x32xf32>
    %84 = vector.broadcast %74 : vector<8x1xf32> to vector<8x32xf32>
    %85 = arith.mulf %84, %83 : vector<8x32xf32>
    %c1_31 = arith.constant 1 : index
    %c0_32 = arith.constant 0 : index
    %c0_33 = arith.constant 0 : index
    %86 = vector.load %arg4[%c1_31, %c0_32, %c0_33] : memref<8x8x32xf32, #tpu.memory_space<vmem>>, vector<1x8x32xf32>
    %87 = vector.shape_cast %86 : vector<1x8x32xf32> to vector<8x32xf32>
    %88 = vector.broadcast %75 : vector<8x1xf32> to vector<8x32xf32>
    %89 = arith.mulf %88, %87 : vector<8x32xf32>
    %90 = arith.addf %85, %89 : vector<8x32xf32>
    %c2_34 = arith.constant 2 : index
    %c0_35 = arith.constant 0 : index
    %c0_36 = arith.constant 0 : index
    %91 = vector.load %arg4[%c2_34, %c0_35, %c0_36] : memref<8x8x32xf32, #tpu.memory_space<vmem>>, vector<1x8x32xf32>
    %92 = vector.shape_cast %91 : vector<1x8x32xf32> to vector<8x32xf32>
    %93 = vector.broadcast %76 : vector<8x1xf32> to vector<8x32xf32>
    %94 = arith.mulf %93, %92 : vector<8x32xf32>
    %95 = arith.addf %90, %94 : vector<8x32xf32>
    %c3_37 = arith.constant 3 : index
    %c0_38 = arith.constant 0 : index
    %c0_39 = arith.constant 0 : index
    %96 = vector.load %arg4[%c3_37, %c0_38, %c0_39] : memref<8x8x32xf32, #tpu.memory_space<vmem>>, vector<1x8x32xf32>
    %97 = vector.shape_cast %96 : vector<1x8x32xf32> to vector<8x32xf32>
    %98 = vector.broadcast %77 : vector<8x1xf32> to vector<8x32xf32>
    %99 = arith.mulf %98, %97 : vector<8x32xf32>
    %100 = arith.addf %95, %99 : vector<8x32xf32>
    %c4_40 = arith.constant 4 : index
    %c0_41 = arith.constant 0 : index
    %c0_42 = arith.constant 0 : index
    %101 = vector.load %arg4[%c4_40, %c0_41, %c0_42] : memref<8x8x32xf32, #tpu.memory_space<vmem>>, vector<1x8x32xf32>
    %102 = vector.shape_cast %101 : vector<1x8x32xf32> to vector<8x32xf32>
    %103 = vector.broadcast %78 : vector<8x1xf32> to vector<8x32xf32>
    %104 = arith.mulf %103, %102 : vector<8x32xf32>
    %105 = arith.addf %100, %104 : vector<8x32xf32>
    %c5_43 = arith.constant 5 : index
    %c0_44 = arith.constant 0 : index
    %c0_45 = arith.constant 0 : index
    %106 = vector.load %arg4[%c5_43, %c0_44, %c0_45] : memref<8x8x32xf32, #tpu.memory_space<vmem>>, vector<1x8x32xf32>
    %107 = vector.shape_cast %106 : vector<1x8x32xf32> to vector<8x32xf32>
    %108 = vector.broadcast %79 : vector<8x1xf32> to vector<8x32xf32>
    %109 = arith.mulf %108, %107 : vector<8x32xf32>
    %110 = arith.addf %105, %109 : vector<8x32xf32>
    %c6_46 = arith.constant 6 : index
    %c0_47 = arith.constant 0 : index
    %c0_48 = arith.constant 0 : index
    %111 = vector.load %arg4[%c6_46, %c0_47, %c0_48] : memref<8x8x32xf32, #tpu.memory_space<vmem>>, vector<1x8x32xf32>
    %112 = vector.shape_cast %111 : vector<1x8x32xf32> to vector<8x32xf32>
    %113 = vector.broadcast %80 : vector<8x1xf32> to vector<8x32xf32>
    %114 = arith.mulf %113, %112 : vector<8x32xf32>
    %115 = arith.addf %110, %114 : vector<8x32xf32>
    %c7_49 = arith.constant 7 : index
    %c0_50 = arith.constant 0 : index
    %c0_51 = arith.constant 0 : index
    %116 = vector.load %arg4[%c7_49, %c0_50, %c0_51] : memref<8x8x32xf32, #tpu.memory_space<vmem>>, vector<1x8x32xf32>
    %117 = vector.shape_cast %116 : vector<1x8x32xf32> to vector<8x32xf32>
    %118 = vector.broadcast %81 : vector<8x1xf32> to vector<8x32xf32>
    %119 = arith.mulf %118, %117 : vector<8x32xf32>
    %120 = arith.addf %115, %119 : vector<8x32xf32>
    %121 = arith.addf %1, %120 : vector<8x32xf32>
    %c0_52 = arith.constant 0 : index
    %c0_53 = arith.constant 0 : index
    %122 = vector.load %arg6[%c0_52, %c0_53] : memref<32x32xf32, #tpu.memory_space<vmem>>, vector<32x32xf32>
    %cst_54 = arith.constant dense<0.000000e+00> : vector<8x32xf32>
    %123 = tpu.matmul %121, %122, %cst_54 {dimension_numbers = #tpu.dot_dimension_numbers<[1], [0], [0], [1], [0, 0, 1, 1], [], []>} : vector<8x32xf32>, vector<32x32xf32>, vector<8x32xf32> -> vector<8x32xf32>
    %c0_55 = arith.constant 0 : index
    %c0_56 = arith.constant 0 : index
    %124 = vector.load %arg7[%c0_55, %c0_56] : memref<1x32xf32, #tpu.memory_space<vmem>>, vector<1x32xf32>
    %125 = vector.broadcast %124 : vector<1x32xf32> to vector<8x32xf32>
    %126 = arith.addf %123, %125 : vector<8x32xf32>
    %cst_57 = arith.constant 0.000000e+00 : f32
    %127 = vector.broadcast %cst_57 : f32 to vector<8x32xf32>
    %128 = arith.maximumf %126, %127 : vector<8x32xf32>
    %129 = arith.mulf %0, %128 : vector<8x32xf32>
    %cst_58 = arith.constant dense<0.000000e+00> : vector<8xf32>
    %130 = vector.multi_reduction <add>, %129, %cst_58 [1] : vector<8x32xf32> to vector<8xf32>
    %cst_59 = arith.constant 0.000000e+00 : f32
    %131 = vector.broadcast %cst_59 : f32 to vector<8xf32>
    %132 = arith.subf %131, %130 : vector<8xf32>
    %133 = math.exp %132 : vector<8xf32>
    %cst_60 = arith.constant 1.000000e+00 : f32
    %134 = vector.broadcast %cst_60 : f32 to vector<8xf32>
    %135 = arith.addf %134, %133 : vector<8xf32>
    %cst_61 = arith.constant 1.000000e+00 : f32
    %136 = vector.broadcast %cst_61 : f32 to vector<8xf32>
    %137 = arith.divf %136, %135 : vector<8xf32>
    %138 = vector.shape_cast %137 : vector<8xf32> to vector<1x1x8xf32>
    %c0_62 = arith.constant 0 : index
    %c0_63 = arith.constant 0 : index
    %c0_64 = arith.constant 0 : index
    %139 = vector.load %arg8[%c0_62, %c0_63, %c0_64] : memref<1x1x8xf32, #tpu.memory_space<vmem>>, vector<1x1x8xf32>
    tpu.vector_store %arg8[%c0_62, %c0_63, %c0_64], %138 {strides = array<i32>} : memref<1x1x8xf32, #tpu.memory_space<vmem>>, vector<1x1x8xf32>,
    return
  }
  func.func @transform_0(%arg0: i32, %arg1: memref<1xi32, #tpu.memory_space<smem>>) -> (i32, i32) {
    %c0_i32 = arith.constant 0 : i32
    %c0_i32_0 = arith.constant 0 : i32
    return %arg0, %c0_i32 : i32, i32
  }
  func.func @transform_1(%arg0: i32, %arg1: memref<1xi32, #tpu.memory_space<smem>>) -> (i32, i32) {
    %c0_i32 = arith.constant 0 : i32
    %c0_i32_0 = arith.constant 0 : i32
    return %arg0, %c0_i32 : i32, i32
  }
  func.func @transform_2(%arg0: i32, %arg1: memref<1xi32, #tpu.memory_space<smem>>) -> (i32, i32, i32) {
    %c0_i32 = arith.constant 0 : i32
    %c0_i32_0 = arith.constant 0 : i32
    %c0_i32_1 = arith.constant 0 : i32
    return %c0_i32, %arg0, %c0_i32_0 : i32, i32, i32
  }
  func.func @transform_3(%arg0: i32, %arg1: memref<1xi32, #tpu.memory_space<smem>>) -> (i32, i32, i32) {
    %c0_i32 = arith.constant 0 : i32
    %c0_i32_0 = arith.constant 0 : i32
    %c0_i32_1 = arith.constant 0 : i32
    return %c0_i32, %arg0, %c0_i32_0 : i32, i32, i32
  }
  func.func @transform_4(%arg0: i32, %arg1: memref<1xi32, #tpu.memory_space<smem>>) -> (i32, i32) {
    %c0_i32 = arith.constant 0 : i32
    %c0_i32_0 = arith.constant 0 : i32
    %c0_i32_1 = arith.constant 0 : i32
    return %c0_i32, %c0_i32_0 : i32, i32
  }
  func.func @transform_5(%arg0: i32, %arg1: memref<1xi32, #tpu.memory_space<smem>>) -> (i32, i32) {
    %c0_i32 = arith.constant 0 : i32
    %c0_i32_0 = arith.constant 0 : i32
    %c0_i32_1 = arith.constant 0 : i32
    return %c0_i32, %c0_i32_0 : i32, i32
  }
  func.func @transform_6(%arg0: i32, %arg1: memref<1xi32, #tpu.memory_space<smem>>) -> (i32, i32, i32) {
    %c0_i32 = arith.constant 0 : i32
    %c0_i32_0 = arith.constant 0 : i32
    %c0_i32_1 = arith.constant 0 : i32
    return %arg0, %c0_i32, %c0_i32_0 : i32, i32, i32
  }
}

</mosaic_0001>

<llo_original>
// kernel: tpu_custom_call.1
$region0: #{tpu_custom_call.1}
  #allocation0 [shape = 'u32[]', space=smem, size = 0x4, offset = 0x4, fixed_abs, tag = 'smem constant byte address 0x4 - core index']
  #allocation1 [shape = 'u32[144,128]{1,0:T(1,128)}', space=vmem, size = 0x12000, scoped, tag = 'internal scratch']
  #allocation2 [shape = 's32[1]{0}', space=sflag, size = 0x4, scoped, tag = 'scoped memory for tpu_custom_call.1']
  #allocation3 [shape = 's32[1]{0:T(128)S(6)}', space=smem, size = 0x200, scoped, tag = 'prefetched SMEM operand 0']
  %s0 = inlined_call_operand.<no memory space> [shape: s32[1], index: 0, kind: input, shape index: {}]
  %s1 = inlined_call_operand.hbm [shape: f32[8,32], index: 1, kind: input, shape index: {}]
  %s2 = inlined_call_operand.hbm [shape: f32[8,32], index: 2, kind: input, shape index: {}]
  %s3 = inlined_call_operand.hbm [shape: f32[8,8,32], index: 3, kind: input, shape index: {}]
  %s4 = inlined_call_operand.hbm [shape: f32[8,8,32], index: 4, kind: input, shape index: {}]
  %s5 = inlined_call_operand.hbm [shape: f32[32,32], index: 5, kind: input, shape index: {}]
  %s6 = inlined_call_operand.vmem [shape: f32[1,32], index: 6, kind: input, shape index: {}]
  %s7 = inlined_call_operand.hbm [shape: f32[1,1,8], index: 7, kind: output, shape index: {}]
  %s8 = sld [smem:[#allocation0]]
  $region54: #{tpu_custom_call.1} parent=0
    _
  %s10 = ssub.s32 1, %s8
  %s11 = scalar_select 0, %s10, %s8
  %12 = sst [smem:[#allocation3]] %s0
  $region1: #{tpu_custom_call.1} parent=0
    #allocation4 [shape = 'u8[4096]{0}', space=vmem, size = 0x1000, scoped, tag = 'input window, operand 1, single buffered']
    #allocation5 [shape = 's32[1]{0}', space=sflag, size = 0x4, scoped, tag = 'scoped memory for tpu_custom_call.1']
    #allocation6 [shape = 's32[1]{0}', space=sflag, size = 0x4, scoped, tag = 'scoped memory for tpu_custom_call.1']
    #allocation7 [shape = 'u8[4096]{0}', space=vmem, size = 0x1000, scoped, tag = 'input window, operand 2, single buffered']
    #allocation8 [shape = 's32[1]{0}', space=sflag, size = 0x4, scoped, tag = 'scoped memory for tpu_custom_call.1']
    #allocation9 [shape = 'u8[32768]{0}', space=vmem, size = 0x8000, scoped, tag = 'input window, operand 3, single buffered']
    #allocation10 [shape = 'u8[32768]{0}', space=vmem, size = 0x8000, scoped, tag = 'input window, operand 4, single buffered']
    #allocation11 [shape = 's32[1]{0}', space=sflag, size = 0x4, scoped, tag = 'scoped memory for tpu_custom_call.1']
    #allocation12 [shape = 'u8[16384]{0}', space=vmem, size = 0x4000, scoped, tag = 'input window, operand 5, single buffered']
    #allocation13 [shape = 'u8[512]{0}', space=vmem, size = 0x400, scoped, tag = 'output window, operand 0, single buffered']
    %13 = vsyncpa [#allocation5], 0
    %14 = vsyncpa [#allocation8], 0
    %15 = vsyncpa [#allocation11], 0
    %16 = vsyncpa [#allocation6], 0
    // Predicated region
    $region2: #{tpu_custom_call.1} parent=1 // pred_check
      _
    $region3: #{tpu_custom_call.1} parent=1 // pred_check_branch
      %18 = sbr.rel (0) target = $region5
    $region4: #{tpu_custom_call.1} parent=1 // pred_region
      %s20 = ssub.s32 128, 128
      %21 = vsyncadd [#allocation5], %s20
      %s23 = sshll.u32 [#allocation4], 4
      %s24 = int_to_ptr.vmem [resolvable:$true] %s23
      %26 = dma.hbm_to_vmem [thread:$0]  %s1, 128, %s24, [#allocation5]
    $region5: #{tpu_custom_call.1} parent=1 // pred_fallthru
      _
    // Predicated region
    $region6: #{tpu_custom_call.1} parent=1 // pred_check
      _
    $region7: #{tpu_custom_call.1} parent=1 // pred_check_branch
      %28 = sbr.rel (0) target = $region9
    $region8: #{tpu_custom_call.1} parent=1 // pred_region
      %s30 = ssub.s32 128, 128
      %31 = vsyncadd [#allocation8], %s30
      %s33 = sshll.u32 [#allocation7], 4
      %s34 = int_to_ptr.vmem [resolvable:$true] %s33
      %36 = dma.hbm_to_vmem [thread:$0]  %s2, 128, %s34, [#allocation8]
    $region9: #{tpu_custom_call.1} parent=1 // pred_fallthru
      _
    // Predicated region
    $region10: #{tpu_custom_call.1} parent=1 // pred_check
      _
    $region11: #{tpu_custom_call.1} parent=1 // pred_check_branch
      %38 = sbr.rel (0) target = $region13
    $region12: #{tpu_custom_call.1} parent=1 // pred_region
      %s40 = ssub.s32 1024, 1024
      %41 = vsyncadd [#allocation8], %s40
      %s42 = sshll.u32 [#allocation9], 4
      %s43 = int_to_ptr.vmem [resolvable:$true] %s42
      %48 = dma.hbm_to_vmem [thread:$0]  %s3, 1024, %s43, [#allocation8], 128, 128, 8
    $region13: #{tpu_custom_call.1} parent=1 // pred_fallthru
      _
    // Predicated region
    $region14: #{tpu_custom_call.1} parent=1 // pred_check
      _
    $region15: #{tpu_custom_call.1} parent=1 // pred_check_branch
      %50 = sbr.rel (0) target = $region17
    $region16: #{tpu_custom_call.1} parent=1 // pred_region
      %s52 = ssub.s32 1024, 1024
      %53 = vsyncadd [#allocation11], %s52
      %s54 = sshll.u32 [#allocation10], 4
      %s55 = int_to_ptr.vmem [resolvable:$true] %s54
      %60 = dma.hbm_to_vmem [thread:$0]  %s4, 1024, %s55, [#allocation11], 128, 128, 8
    $region17: #{tpu_custom_call.1} parent=1 // pred_fallthru
      _
    // Predicated region
    $region18: #{tpu_custom_call.1} parent=1 // pred_check
      _
    $region19: #{tpu_custom_call.1} parent=1 // pred_check_branch
      %62 = sbr.rel (0) target = $region21
    $region20: #{tpu_custom_call.1} parent=1 // pred_region
      %s64 = ssub.s32 512, 512
      %65 = vsyncadd [#allocation11], %s64
      %s66 = sshll.u32 [#allocation12], 4
      %s67 = int_to_ptr.vmem [resolvable:$true] %s66
      %72 = dma.hbm_to_vmem [thread:$0]  %s5, 512, %s67, [#allocation11], 128, 128, 8
    $region21: #{tpu_custom_call.1} parent=1 // pred_fallthru
      _
    // Predicated region
    $region22: #{tpu_custom_call.1} parent=1 // pred_check
      _
    $region23: #{tpu_custom_call.1} parent=1 // pred_check_branch
      %74 = sbr.rel (0) target = $region25
    $region24: #{tpu_custom_call.1} parent=1 // pred_region
      _
    $region25: #{tpu_custom_call.1} parent=1 // pred_fallthru
      _
    // Predicated region
    $region26: #{tpu_custom_call.1} parent=1 // pred_check
      _
    $region27: #{tpu_custom_call.1} parent=1 // pred_check_branch
      %76 = sbr.rel (0) target = $region29
    $region28: #{tpu_custom_call.1} parent=1 // pred_region
      %77 = dma.done [#allocation5], 128
    $region29: #{tpu_custom_call.1} parent=1 // pred_fallthru
      _
    // Predicated region
    $region30: #{tpu_custom_call.1} parent=1 // pred_check
      _
    $region31: #{tpu_custom_call.1} parent=1 // pred_check_branch
      %79 = sbr.rel (0) target = $region33
    $region32: #{tpu_custom_call.1} parent=1 // pred_region
      %80 = dma.done [#allocation8], 128
    $region33: #{tpu_custom_call.1} parent=1 // pred_fallthru
      _
    // Predicated region
    $region34: #{tpu_custom_call.1} parent=1 // pred_check
      _
    $region35: #{tpu_custom_call.1} parent=1 // pred_check_branch
      %82 = sbr.rel (0) target = $region37
    $region36: #{tpu_custom_call.1} parent=1 // pred_region
      %83 = dma.done [#allocation8], 1024
    $region37: #{tpu_custom_call.1} parent=1 // pred_fallthru
      _
    // Predicated region
    $region38: #{tpu_custom_call.1} parent=1 // pred_check
      _
    $region39: #{tpu_custom_call.1} parent=1 // pred_check_branch
      %85 = sbr.rel (0) target = $region41
    $region40: #{tpu_custom_call.1} parent=1 // pred_region
      %86 = dma.done [#allocation11], 1024
    $region41: #{tpu_custom_call.1} parent=1 // pred_fallthru
      _
    // Predicated region
    $region42: #{tpu_custom_call.1} parent=1 // pred_check
      _
    $region43: #{tpu_custom_call.1} parent=1 // pred_check_branch
      %88 = sbr.rel (0) target = $region45
    $region44: #{tpu_custom_call.1} parent=1 // pred_region
      %89 = dma.done [#allocation11], 512
    $region45: #{tpu_custom_call.1} parent=1 // pred_fallthru
      _
    %v90 = vld [vmem:[#allocation4] sm:$0xff]
    %v91 = vld [vmem:[#allocation7] sm:$0xff]
    %v92 = vld [vmem:[#allocation10] sm:$0xff]
    %v93 = vmul.f32 %v90, %v92
    %vm94 = vcmask 261120
    %v95 = vsel %vm94, %v93, 0.0
    %96 = vadd.xlane.f32.xlu0 %v95
    %v97 = vpop.xlane.xlu0 %96
    %s98 = scalar_lea.vmem [#allocation10], 8
    %v99 = vld [vmem:[%s98] sm:$0xff]
    %v100 = vmul.f32 %v90, %v99
    %v101 = vsel %vm94, %v100, 0.0
    %102 = vadd.xlane.f32.xlu0 %v101
    %v103 = vpop.xlane.xlu0 %102
    %s104 = scalar_lea.vmem [#allocation10], 16
    %v105 = vld [vmem:[%s104] sm:$0xff]
    %v106 = vmul.f32 %v90, %v105
    %v107 = vsel %vm94, %v106, 0.0
    %108 = vadd.xlane.f32.xlu0 %v107
    %v109 = vpop.xlane.xlu0 %108
    %s110 = scalar_lea.vmem [#allocation10], 24
    %v111 = vld [vmem:[%s110] sm:$0xff]
    %v112 = vmul.f32 %v90, %v111
    %v113 = vsel %vm94, %v112, 0.0
    %114 = vadd.xlane.f32.xlu0 %v113
    %v115 = vpop.xlane.xlu0 %114
    %s116 = scalar_lea.vmem [#allocation10], 32
    %v117 = vld [vmem:[%s116] sm:$0xff]
    %v118 = vmul.f32 %v90, %v117
    %v119 = vsel %vm94, %v118, 0.0
    %120 = vadd.xlane.f32.xlu0 %v119
    %v121 = vpop.xlane.xlu0 %120
    %s122 = scalar_lea.vmem [#allocation10], 40
    %v123 = vld [vmem:[%s122] sm:$0xff]
    %v124 = vmul.f32 %v90, %v123
    %v125 = vsel %vm94, %v124, 0.0
    %126 = vadd.xlane.f32.xlu0 %v125
    %v127 = vpop.xlane.xlu0 %126
    %s128 = scalar_lea.vmem [#allocation10], 48
    %v129 = vld [vmem:[%s128] sm:$0xff]
    %v130 = vmul.f32 %v90, %v129
    %v131 = vsel %vm94, %v130, 0.0
    %132 = vadd.xlane.f32.xlu0 %v131
    %v133 = vpop.xlane.xlu0 %132
    %s134 = scalar_lea.vmem [#allocation10], 56
    %v135 = vld [vmem:[%s134] sm:$0xff]
    %v136 = vmul.f32 %v90, %v135
    %v137 = vsel %vm94, %v136, 0.0
    %138 = vadd.xlane.f32.xlu0 %v137
    %v139 = vpop.xlane.xlu0 %138
    %v140 = vmax.f32 %v97, %v103
    %v141 = vmax.f32 %v140, %v109
    %v142 = vmax.f32 %v141, %v115
    %v143 = vmax.f32 %v142, %v121
    %v144 = vmax.f32 %v143, %v127
    %v145 = vmax.f32 %v144, %v133
    %v146 = vmax.f32 %v145, %v139
    %v147 = vsub.f32 %v97, %v146
    %v148 = vmul.f32 %v147, 1.442695
    %v149 = vpow.pop %v148
    %v150 = vsub.f32 %v103, %v146
    %v151 = vmul.f32 %v150, 1.442695
    %v152 = vpow.pop %v151
    %v153 = vsub.f32 %v109, %v146
    %v154 = vmul.f32 %v153, 1.442695
    %v155 = vpow.pop %v154
    %v156 = vsub.f32 %v115, %v146
    %v157 = vmul.f32 %v156, 1.442695
    %v158 = vpow.pop %v157
    %v159 = vsub.f32 %v121, %v146
    %v160 = vmul.f32 %v159, 1.442695
    %v161 = vpow.pop %v160
    %v162 = vsub.f32 %v127, %v146
    %v163 = vmul.f32 %v162, 1.442695
    %v164 = vpow.pop %v163
    %v165 = vsub.f32 %v133, %v146
    %v166 = vmul.f32 %v165, 1.442695
    %v167 = vpow.pop %v166
    %v168 = vsub.f32 %v139, %v146
    %v169 = vmul.f32 %v168, 1.442695
    %v170 = vpow.pop %v169
    %v171 = vadd.f32 %v149, %v152
    %v172 = vadd.f32 %v171, %v155
    %v173 = vadd.f32 %v172, %v158
    %v174 = vadd.f32 %v173, %v161
    %v175 = vadd.f32 %v174, %v164
    %v176 = vadd.f32 %v175, %v167
    %v177 = vadd.f32 %v176, %v170
    %v178 = vrcp.pop %v177
    %v179 = vmul.f32 1.0, %v178
    %v180 = vmul.f32 %v149, %v179
    %v181 = vmul.f32 %v152, %v179
    %v182 = vmul.f32 %v155, %v179
    %v183 = vmul.f32 %v158, %v179
    %v184 = vmul.f32 %v161, %v179
    %v185 = vmul.f32 %v164, %v179
    %v186 = vmul.f32 %v167, %v179
    %v187 = vmul.f32 %v170, %v179
    %v188 = vld [vmem:[#allocation9] sm:$0xff]
    %v189 = vmul.f32 %v180, %v188
    %s190 = scalar_lea.vmem [#allocation9], 8
    %v191 = vld [vmem:[%s190] sm:$0xff]
    %v192 = vmul.f32 %v181, %v191
    %v193 = vadd.f32 %v189, %v192
    %s194 = scalar_lea.vmem [#allocation9], 16
    %v195 = vld [vmem:[%s194] sm:$0xff]
    %v196 = vmul.f32 %v182, %v195
    %v197 = vadd.f32 %v193, %v196
    %s198 = scalar_lea.vmem [#allocation9], 24
    %v199 = vld [vmem:[%s198] sm:$0xff]
    %v200 = vmul.f32 %v183, %v199
    %v201 = vadd.f32 %v197, %v200
    %s202 = scalar_lea.vmem [#allocation9], 32
    %v203 = vld [vmem:[%s202] sm:$0xff]
    %v204 = vmul.f32 %v184, %v203
    %v205 = vadd.f32 %v201, %v204
    %s206 = scalar_lea.vmem [#allocation9], 40
    %v207 = vld [vmem:[%s206] sm:$0xff]
    %v208 = vmul.f32 %v185, %v207
    %v209 = vadd.f32 %v205, %v208
    %s210 = scalar_lea.vmem [#allocation9], 48
    %v211 = vld [vmem:[%s210] sm:$0xff]
    %v212 = vmul.f32 %v186, %v211
    %v213 = vadd.f32 %v209, %v212
    %s214 = scalar_lea.vmem [#allocation9], 56
    %v215 = vld [vmem:[%s214] sm:$0xff]
    %v216 = vmul.f32 %v187, %v215
    %v217 = vadd.f32 %v213, %v216
    %v218 = vadd.f32 %v91, %v217
    %v219 = vld [vmem:[#allocation12] sm:$0xff]
    %v220 = vld [vmem:[#allocation12 + $0x8] sm:$0xff]
    %v221 = vld [vmem:[#allocation12 + $0x10] sm:$0xff]
    %v222 = vld [vmem:[#allocation12 + $0x18] sm:$0xff]
    %v223 = vld [vmem:[%s6] sm:$0x1]
    %v225 = vlaneseq
    %v226 = vshrl.u32 %v225, 7
    %v227 = vsub.s32 0, %v226
    %v228 = vrot.slane %v223, %v227
    %v231 = vsel %vm94, %v218, 0
    %233 = vmatprep.subr.mxu0 0.0
    %234 = vmatpush1.msra.mxu0 %v219
    %235 = vmatprep.subr.mxu0 0.0
    %236 = vmatpush1.msra.mxu0 %v220
    %237 = vmatprep.subr.mxu0 0.0
    %238 = vmatpush1.msra.mxu0 %v221
    %239 = vmatprep.subr.mxu0 0.0
    %240 = vmatpush1.msra.mxu0 %v222
    %241 = vmatprep.subr.mxu0 0.0
    %242 = vmatpush1.msra.mxu0 0.0
    %243 = vmatprep.subr.mxu0 0.0
    %244 = vmatpush1.msra.mxu0 0.0
    %245 = vmatprep.subr.mxu0 0.0
    %246 = vmatpush1.msra.mxu0 0.0
    %247 = vmatprep.subr.mxu0 0.0
    %248 = vmatpush1.msra.mxu0 0.0
    %249 = vmatprep.subr.mxu0 0.0
    %250 = vmatpush1.msra.mxu0 0.0
    %251 = vmatprep.subr.mxu0 0.0
    %252 = vmatpush1.msra.mxu0 0.0
    %253 = vmatprep.subr.mxu0 0.0
    %254 = vmatpush1.msra.mxu0 0.0
    %255 = vmatprep.subr.mxu0 0.0
    %256 = vmatpush1.msra.mxu0 0.0
    %257 = vmatprep.subr.mxu0 0.0
    %258 = vmatpush1.msra.mxu0 0.0
    %259 = vmatprep.subr.mxu0 0.0
    %260 = vmatpush1.msra.mxu0 0.0
    %261 = vmatprep.subr.mxu0 0.0
    %262 = vmatpush1.msra.mxu0 0.0
    %263 = vmatprep.subr.mxu0 0.0
    %264 = vmatpush1.msra.mxu0 0.0
    %265 = vmatprep.subr.mxu0 0.0
    %266 = vmatpush1.msra.mxu0 0.0
    %267 = vmatprep.subr.mxu0 0.0
    %268 = vmatpush1.msra.mxu0 0.0
    %269 = vmatprep.subr.mxu0 0.0
    %270 = vmatpush1.msra.mxu0 0.0
    %271 = vmatprep.subr.mxu0 0.0
    %272 = vmatpush1.msra.mxu0 0.0
    %273 = vmatprep.subr.mxu0 0.0
    %274 = vmatpush1.msra.mxu0 0.0
    %275 = vmatprep.subr.mxu0 0.0
    %276 = vmatpush1.msra.mxu0 0.0
    %277 = vmatprep.subr.mxu0 0.0
    %278 = vmatpush1.msra.mxu0 0.0
    %279 = vmatprep.subr.mxu0 0.0
    %280 = vmatpush1.msra.mxu0 0.0
    %281 = vmatprep.subr.mxu0 0.0
    %282 = vmatpush1.msra.mxu0 0.0
    %283 = vmatprep.subr.mxu0 0.0
    %284 = vmatpush1.msra.mxu0 0.0
    %285 = vmatprep.subr.mxu0 0.0
    %286 = vmatpush1.msra.mxu0 0.0
    %287 = vmatprep.subr.mxu0 0.0
    %288 = vmatpush1.msra.mxu0 0.0
    %289 = vmatprep.subr.mxu0 0.0
    %290 = vmatpush1.msra.mxu0 0.0
    %291 = vmatprep.subr.mxu0 0.0
    %292 = vmatpush1.msra.mxu0 0.0
    %293 = vmatprep.subr.mxu0 0.0
    %294 = vmatpush1.msra.mxu0 0.0
    %295 = vmatprep.subr.mxu0 0.0
    %296 = vmatpush1.msra.mxu0 0.0
    %297 = vmatprep.mubr.f32.mxu0 0.0
    %298 = vmatmul.mubr.f32.gmra.mrb[0].mxu0 %v231
    %v299 = vpop.f32.mrb[0].mxu0
    %v300 = vadd.f32 %v228, %v299
    %v301 = vpop.f32.mrb[0].mxu0
    %302 = vdwg.mxu0
    %v303 = vmax.f32 %v300, 0.0
    %v304 = vmul.f32 %v90, %v303
    %v305 = vsel %vm94, %v304, 0.0
    %306 = vadd.xlane.f32.xlu0 %v305
    %v307 = vpop.xlane.xlu0 %306
    %v308 = vsub.f32 0.0, %v307
    %v309 = vmul.f32 %v308, 1.442695
    %v310 = vpow.pop %v309
    %v311 = vadd.f32 %v310, 1.0
    %v312 = vrcp.pop %v311
    %v313 = vmul.f32 1.0, %v312
    %v315 = vlaneseq
    %v316 = vand.u32 %v315, 127
    %v317 = vlaneseq
    %v318 = vshrl.u32 %v317, 7
    %v319 = vsub.s32 %v316, %v318
    %v320 = vrot.slane %v313, %v319
    %vm322 = vcmask 57344
    %323 = vst.msk [vmem:[#allocation13] sm:$0x1] %vm322, %v320
    // Predicated region
    $region46: #{tpu_custom_call.1} parent=1 // pred_check
      _
    $region47: #{tpu_custom_call.1} parent=1 // pred_check_branch
      %325 = sbr.rel (0) target = $region49
    $region48: #{tpu_custom_call.1} parent=1 // pred_region
      %s327 = ssub.s32 16, 16
      %328 = vsyncadd [#allocation6], %s327
      %s330 = sshll.u32 [#allocation13], 4
      %s331 = int_to_ptr.vmem [resolvable:$true] %s330
      %333 = dma.vmem_to_hbm [thread:$0]  %s331, 16, %s7, [#allocation6]
    $region49: #{tpu_custom_call.1} parent=1 // pred_fallthru
      _
    // Predicated region
    $region50: #{tpu_custom_call.1} parent=1 // pred_check
      _
    $region51: #{tpu_custom_call.1} parent=1 // pred_check_branch
      %335 = sbr.rel (0) target = $region53
    $region52: #{tpu_custom_call.1} parent=1 // pred_region
      %336 = dma.done [#allocation6], 16
    $region53: #{tpu_custom_call.1} parent=1 // pred_fallthru
      _
    %337 = vsyncpa [#allocation5], 1
    %338 = vsyncpa [#allocation8], 1
    %339 = vsyncpa [#allocation11], 1
    %340 = vsyncpa [#allocation6], 1

</llo_original>
